<compile_context>
chip_gen: v7x
topology: tpu7x:2x2x1
jax: 0.10.0
libtpu: 0.0.40
codegen_flags: <defaults>
</compile_context>

<pallas_src>
import jax
import jax.numpy as jnp
from jax.experimental import pallas as pl
from jax.experimental.pallas import tpu as pltpu


def adaptive_attention_kernel(sp_ref, ds_ref, wc_ref, wds_ref, wa_ref, out_ref):
    # sp_ref : (BB, P, H)  f32   spatial image features for this batch block
    #                            (read once; reused for both projection and ct)
    # ds_ref : (2, BB, H)  f32   stacked [decoder_out; st] for this batch block
    # wc_ref : (H, A)      bf16  cnn_att.weight.T           (weight-resident)
    # wds_ref: (H, 2A)     f32   [dec_att.weight | sen_out.weight].T (resident)
    # wa_ref : (1, A)      f32   att_out.weight              (weight-resident)
    # out_ref: (BB, Wpad)  f32   packed [alpha | beta | c_hat | zero padding]
    BB, P, H = sp_ref.shape
    A = wa_ref.shape[1]

    sp = sp_ref[...]                                   # (BB, P, H) f32
    ds = ds_ref[...]                                   # (2, BB, H) f32
    st = ds[1]                                         # (BB, H)    f32
    wa = wa_ref[...]                                   # (1, A)

    # --- spatial projection: one (BB*P, H) x (H, A) MXU matmul ---------------
    # bf16 operands / f32 accumulation.  P % 8 == 0 -> reshape is layout-free.
    sp2 = sp.reshape(BB * P, H).astype(jnp.bfloat16)
    cnn_out = jnp.dot(sp2, wc_ref[...],
                      preferred_element_type=jnp.float32).reshape(BB, P, A)

    # --- tiny fused dec/sentinel projection: (2*BB, H) x (H, 2A) --------------
    # Left in f32 (negligible FLOPs, keeps the sentinel gate numerics tight).
    ds2 = ds.reshape(2 * BB, H)
    fused = jnp.dot(ds2, wds_ref[...],
                    preferred_element_type=jnp.float32)        # (2*BB, 2A)
    dec_out = fused[:BB, :A]                                   # decoder @ wd.T
    sen_out = fused[BB:, A:]                                   # st      @ ws.T

    # --- spatial attention logits (att_out has one column -> VPU reduce) -----
    addition_out = jnp.tanh(cnn_out + dec_out[:, None, :])     # (BB, P, A)
    zt = jnp.sum(addition_out * wa[None, :, :], axis=-1)       # (BB, P)

    # --- sentinel gate logit ---------------------------------------------------
    out = jnp.tanh(dec_out + sen_out)                          # (BB, A)
    out_z = jnp.sum(out * wa, axis=-1, keepdims=True)          # (BB, 1)

    # --- shared shifted softmax over [zt, out_z] (shift-invariant) ------------
    cmax = jnp.maximum(jnp.max(zt, axis=1, keepdims=True), out_z)   # (BB, 1)
    ezc = jnp.exp(zt - cmax)                                        # (BB, P)
    eoc = jnp.exp(out_z - cmax)                                     # (BB, 1)
    s = jnp.sum(ezc, axis=1, keepdims=True)                         # (BB, 1)
    alpha_t = ezc * pl.reciprocal(s, approx=True)                   # softmax(zt)
    beta_t = eoc * pl.reciprocal(s + eoc, approx=True)              # last col of
                                                                    # softmax([zt,out_z])

    # --- context vector and adaptive blend (f32 spatial / st) -----------------
    ct = jnp.sum(sp * alpha_t[:, :, None], axis=1)             # (BB, H)
    c_hat = beta_t * st + (1.0 - beta_t) * ct                  # (BB, H)

    # Lane-dense packed store (padded to a multiple of 128 lanes).
    packed = jnp.concatenate([alpha_t, beta_t, c_hat], axis=1)  # (BB, P+1+H)
    pad = out_ref.shape[1] - packed.shape[1]
    if pad:
        packed = jnp.concatenate(
            [packed, jnp.zeros((BB, pad), jnp.float32)], axis=1)
    out_ref[...] = packed.astype(out_ref.dtype)


def adaptive_attention(spatial_image, decoder_out, st,
                       w_cnn, w_dec, w_sen, w_att, *, block_b=8):
    B, P, H = spatial_image.shape
    A = w_cnn.shape[0]
    W = P + 1 + H
    Wpad = ((W + 127) // 128) * 128

    BB = block_b if (B % block_b == 0) else B
    grid = (B // BB,)

    # Host-side (XLA) layout plumbing only: pre-transposed weights, and a stack
    # of the two small (B, H) operands.  The dominant tensor (spatial_image) is
    # passed straight through, untouched.
    wc_t = w_cnn.T.astype(jnp.bfloat16)                               # (H, A)
    wds = jnp.concatenate([w_dec, w_sen], axis=0).T                   # (H, 2A) f32
    ds = jnp.stack([decoder_out, st], axis=0)                         # (2, B, H)

    cost = pl.CostEstimate(
        flops=(2 * B * P * H * A            # spatial projection
               + 2 * (2 * B) * H * (2 * A)  # fused dec/sentinel projection
               + 2 * B * (P + 1) * A        # att_out reductions
               + 2 * B * P * H),            # ct weighted sum
        transcendentals=B * (P + 1) * (A + 1),
        bytes_accessed=(4 * B * P * H + 4 * 2 * B * H + 4 * B * Wpad
                        + 2 * H * A + 4 * H * 2 * A + 4 * A),
    )

    packed = pl.pallas_call(
        adaptive_attention_kernel,
        out_shape=jax.ShapeDtypeStruct((B, Wpad), jnp.float32),
        grid_spec=pltpu.PrefetchScalarGridSpec(
            num_scalar_prefetch=0,
            grid=grid,
            in_specs=[
                pl.BlockSpec((BB, P, H), lambda i: (i, 0, 0)),   # spatial (once)
                pl.BlockSpec((2, BB, H), lambda i: (0, i, 0)),   # [dec; st]
                pl.BlockSpec((H, A), lambda i: (0, 0)),          # wc.T  (resident)
                pl.BlockSpec((H, 2 * A), lambda i: (0, 0)),      # [wd|ws].T
                pl.BlockSpec((1, A), lambda i: (0, 0)),          # att_out.weight
            ],
            out_specs=pl.BlockSpec((BB, Wpad), lambda i: (i, 0)),
        ),
        compiler_params=pltpu.CompilerParams(
            dimension_semantics=("parallel",)),
        cost_estimate=cost,
    )(spatial_image, ds, wc_t, wds, w_att)

    alpha_t = packed[:, :P]
    beta_t = packed[:, P:P + 1]
    c_hat = packed[:, P + 1:W]
    return alpha_t, beta_t, c_hat


def xavier_uniform(key, shape):
    # shape = (out_features, in_features), matching torch.nn.Linear.weight
    fan_out, fan_in = shape
    bound = (6.0 / (fan_in + fan_out)) ** 0.5
    return jax.random.uniform(key, shape, jnp.float32, -bound, bound)


if __name__ == "__main__":
    # B=16 so the batch grid actually takes two 8-row steps; still a toy size.
    B, P, H, A = 16, 8, 32, 16   # batch, num_pixels, hidden_size, att_dim

    key = jax.random.PRNGKey(0)
    k_sp, k_dec, k_st, k_wc, k_wd, k_ws, k_wa = jax.random.split(key, 7)

    spatial_image = jax.random.normal(k_sp, (B, P, H), jnp.float32)
    decoder_out = jax.random.normal(k_dec, (B, H), jnp.float32)
    st = jax.random.normal(k_st, (B, H), jnp.float32)

    w_cnn = xavier_uniform(k_wc, (A, H))   # cnn_att.weight
    w_dec = xavier_uniform(k_wd, (A, H))   # dec_att.weight
    w_sen = xavier_uniform(k_ws, (A, H))   # sen_out.weight
    w_att = xavier_uniform(k_wa, (1, A))   # att_out.weight

    alpha_t, beta_t, c_hat = adaptive_attention(
        spatial_image, decoder_out, st, w_cnn, w_dec, w_sen, w_att)
    jax.block_until_ready((alpha_t, beta_t, c_hat))

    # Pure-f32 JAX reference (dropout = identity, eval mode).  Tolerance is
    # loosened vs. the previous 1e-5 because the spatial projection now runs
    # with bf16 MXU operands (f32 accumulation), per the performance review.
    cnn_out = jnp.einsum('bph,ah->bpa', spatial_image, w_cnn)
    dec_o = decoder_out @ w_dec.T
    add = jnp.tanh(cnn_out + dec_o[:, None, :])
    zt = jnp.einsum('bpa,oa->bpo', add, w_att)[:, :, 0]
    alpha_ref = jax.nn.softmax(zt, axis=1)
    ct = jnp.sum(spatial_image * alpha_ref[:, :, None], axis=1)
    out = jnp.tanh(dec_o + st @ w_sen.T) @ w_att.T
    alpha_hat = jax.nn.softmax(jnp.concatenate([zt, out], axis=1), axis=1)
    beta_ref = alpha_hat[:, -1:]
    chat_ref = beta_ref * st + (1.0 - beta_ref) * ct

    assert jnp.allclose(alpha_t, alpha_ref, atol=3e-2, rtol=3e-2)
    assert jnp.allclose(beta_t, beta_ref, atol=3e-2, rtol=3e-2)
    assert jnp.allclose(c_hat, chat_ref, atol=3e-2, rtol=3e-2)

    print("KERNEL_OK")
</pallas_src>

<mosaic_0001>
module attributes {stable_mosaic.version = 11 : i64} {
  func.func @adaptive_attention_kernel(%arg0: i32, %arg1: memref<8x8x32xf32, #tpu.memory_space<vmem>>, %arg2: memref<2x8x32xf32, #tpu.memory_space<vmem>>, %arg3: memref<32x16xbf16, #tpu.memory_space<vmem>>, %arg4: memref<32x32xf32, #tpu.memory_space<vmem>>, %arg5: memref<1x16xf32, #tpu.memory_space<vmem>>, %arg6: memref<8x128xf32, #tpu.memory_space<vmem>>) attributes {dimension_semantics = [#tpu.dimension_semantics<parallel>], iteration_bounds = array<i64: 2>, scalar_prefetch = 0 : i64, scratch_operands = 0 : i64, tpu.core_type = #tpu.core_type<tc>, window_params = [{transform_indices = @transform_0, window_bounds = array<i64: 8, 8, 32>}, {transform_indices = @transform_1, window_bounds = array<i64: 2, 8, 32>}, {pipeline_mode = #tpu.pipeline_mode<synchronous>, transform_indices = @transform_2, window_bounds = array<i64: 32, 16>}, {pipeline_mode = #tpu.pipeline_mode<synchronous>, transform_indices = @transform_3, window_bounds = array<i64: 32, 32>}, {pipeline_mode = #tpu.pipeline_mode<synchronous>, transform_indices = @transform_4, window_bounds = array<i64: 1, 16>}, {transform_indices = @transform_5, window_bounds = array<i64: 8, 128>}]} {
    %c0 = arith.constant 0 : index
    %c0_0 = arith.constant 0 : index
    %c0_1 = arith.constant 0 : index
    %0 = vector.load %arg1[%c0, %c0_0, %c0_1] : memref<8x8x32xf32, #tpu.memory_space<vmem>>, vector<8x8x32xf32>
    %c0_2 = arith.constant 0 : index
    %c0_3 = arith.constant 0 : index
    %c0_4 = arith.constant 0 : index
    %1 = vector.load %arg2[%c0_2, %c0_3, %c0_4] : memref<2x8x32xf32, #tpu.memory_space<vmem>>, vector<2x8x32xf32>
    %2 = vector.extract_strided_slice %1 {offsets = [1, 0, 0], sizes = [1, 8, 32], strides = [1, 1, 1]} : vector<2x8x32xf32> to vector<1x8x32xf32>
    %3 = vector.shape_cast %2 : vector<1x8x32xf32> to vector<8x32xf32>
    %c0_5 = arith.constant 0 : index
    %c0_6 = arith.constant 0 : index
    %4 = vector.load %arg5[%c0_5, %c0_6] : memref<1x16xf32, #tpu.memory_space<vmem>>, vector<1x16xf32>
    %5 = vector.shape_cast %0 : vector<8x8x32xf32> to vector<64x32xf32>
    %6 = arith.truncf %5 : vector<64x32xf32> to vector<64x32xbf16>
    %c0_7 = arith.constant 0 : index
    %c0_8 = arith.constant 0 : index
    %7 = vector.load %arg3[%c0_7, %c0_8] : memref<32x16xbf16, #tpu.memory_space<vmem>>, vector<32x16xbf16>
    %cst = arith.constant dense<0.000000e+00> : vector<64x16xf32>
    %8 = tpu.matmul %6, %7, %cst {dimension_numbers = #tpu.dot_dimension_numbers<[1], [0], [0], [1], [0, 0, 1, 1], [], []>} : vector<64x32xbf16>, vector<32x16xbf16>, vector<64x16xf32> -> vector<64x16xf32>
    %9 = vector.shape_cast %8 : vector<64x16xf32> to vector<8x8x16xf32>
    %10 = vector.shape_cast %1 : vector<2x8x32xf32> to vector<16x32xf32>
    %c0_9 = arith.constant 0 : index
    %c0_10 = arith.constant 0 : index
    %11 = vector.load %arg4[%c0_9, %c0_10] : memref<32x32xf32, #tpu.memory_space<vmem>>, vector<32x32xf32>
    %cst_11 = arith.constant dense<0.000000e+00> : vector<16x32xf32>
    %12 = tpu.matmul %10, %11, %cst_11 {dimension_numbers = #tpu.dot_dimension_numbers<[1], [0], [0], [1], [0, 0, 1, 1], [], []>} : vector<16x32xf32>, vector<32x32xf32>, vector<16x32xf32> -> vector<16x32xf32>
    %13 = vector.extract_strided_slice %12 {offsets = [0, 0], sizes = [8, 16], strides = [1, 1]} : vector<16x32xf32> to vector<8x16xf32>
    %14 = vector.extract_strided_slice %12 {offsets = [8, 16], sizes = [8, 16], strides = [1, 1]} : vector<16x32xf32> to vector<8x16xf32>
    %15 = vector.shape_cast %13 : vector<8x16xf32> to vector<8x1x16xf32>
    %16 = vector.broadcast %15 : vector<8x1x16xf32> to vector<8x8x16xf32>
    %17 = arith.addf %9, %16 : vector<8x8x16xf32>
    %18 = math.tanh %17 : vector<8x8x16xf32>
    %19 = vector.shape_cast %4 : vector<1x16xf32> to vector<1x1x16xf32>
    %20 = vector.broadcast %19 : vector<1x1x16xf32> to vector<8x8x16xf32>
    %21 = arith.mulf %18, %20 : vector<8x8x16xf32>
    %cst_12 = arith.constant dense<0.000000e+00> : vector<8x8xf32>
    %22 = vector.multi_reduction <add>, %21, %cst_12 [2] : vector<8x8x16xf32> to vector<8x8xf32>
    %23 = arith.addf %13, %14 : vector<8x16xf32>
    %24 = math.tanh %23 : vector<8x16xf32>
    %25 = vector.broadcast %4 : vector<1x16xf32> to vector<8x16xf32>
    %26 = arith.mulf %24, %25 : vector<8x16xf32>
    %cst_13 = arith.constant dense<0.000000e+00> : vector<8xf32>
    %27 = vector.multi_reduction <add>, %26, %cst_13 [1] : vector<8x16xf32> to vector<8xf32>
    %28 = vector.shape_cast %27 : vector<8xf32> to vector<8x1xf32>
    %cst_14 = arith.constant dense<0xFF800000> : vector<8xf32>
    %29 = vector.multi_reduction <maximumf>, %22, %cst_14 [1] : vector<8x8xf32> to vector<8xf32>
    %30 = vector.shape_cast %29 : vector<8xf32> to vector<8x1xf32>
    %31 = arith.maximumf %30, %28 : vector<8x1xf32>
    %32 = vector.broadcast %31 : vector<8x1xf32> to vector<8x8xf32>
    %33 = arith.subf %22, %32 : vector<8x8xf32>
    %34 = math.exp %33 : vector<8x8xf32>
    %35 = arith.subf %28, %31 : vector<8x1xf32>
    %36 = math.exp %35 : vector<8x1xf32>
    %cst_15 = arith.constant dense<0.000000e+00> : vector<8xf32>
    %37 = vector.multi_reduction <add>, %34, %cst_15 [1] : vector<8x8xf32> to vector<8xf32>
    %38 = vector.shape_cast %37 : vector<8xf32> to vector<8x1xf32>
    %39 = tpu.reciprocal %38 {approx = true} : vector<8x1xf32> -> vector<8x1xf32>
    %40 = vector.broadcast %39 : vector<8x1xf32> to vector<8x8xf32>
    %41 = arith.mulf %34, %40 : vector<8x8xf32>
    %42 = arith.addf %38, %36 : vector<8x1xf32>
    %43 = tpu.reciprocal %42 {approx = true} : vector<8x1xf32> -> vector<8x1xf32>
    %44 = arith.mulf %36, %43 : vector<8x1xf32>
    %45 = vector.shape_cast %41 : vector<8x8xf32> to vector<8x8x1xf32>
    %46 = vector.broadcast %45 : vector<8x8x1xf32> to vector<8x8x32xf32>
    %47 = arith.mulf %0, %46 : vector<8x8x32xf32>
    %cst_16 = arith.constant dense<0.000000e+00> : vector<8x32xf32>
    %48 = vector.multi_reduction <add>, %47, %cst_16 [1] : vector<8x8x32xf32> to vector<8x32xf32>
    %49 = vector.broadcast %44 : vector<8x1xf32> to vector<8x32xf32>
    %50 = arith.mulf %49, %3 : vector<8x32xf32>
    %cst_17 = arith.constant 1.000000e+00 : f32
    %51 = vector.broadcast %cst_17 : f32 to vector<8x1xf32>
    %52 = arith.subf %51, %44 : vector<8x1xf32>
    %53 = vector.broadcast %52 : vector<8x1xf32> to vector<8x32xf32>
    %54 = arith.mulf %53, %48 : vector<8x32xf32>
    %55 = arith.addf %50, %54 : vector<8x32xf32>
    %56 = tpu.concatenate %41, %44, %55 in 1 : vector<8x8xf32>, vector<8x1xf32>, vector<8x32xf32> -> vector<8x41xf32>
    %cst_18 = arith.constant 0.000000e+00 : f32
    %57 = vector.broadcast %cst_18 : f32 to vector<8x87xf32>
    %58 = tpu.concatenate %56, %57 in 1 : vector<8x41xf32>, vector<8x87xf32> -> vector<8x128xf32>
    %c0_19 = arith.constant 0 : index
    %c0_20 = arith.constant 0 : index
    %59 = vector.load %arg6[%c0_19, %c0_20] : memref<8x128xf32, #tpu.memory_space<vmem>>, vector<8x128xf32>
    tpu.vector_store %arg6[%c0_19, %c0_20], %58 {strides = array<i32>} : memref<8x128xf32, #tpu.memory_space<vmem>>, vector<8x128xf32>,
    return
  }
  func.func @transform_0(%arg0: i32) -> (i32, i32, i32) {
    %c0_i32 = arith.constant 0 : i32
    %c0_i32_0 = arith.constant 0 : i32
    %c0_i32_1 = arith.constant 0 : i32
    return %arg0, %c0_i32, %c0_i32_0 : i32, i32, i32
  }
  func.func @transform_1(%arg0: i32) -> (i32, i32, i32) {
    %c0_i32 = arith.constant 0 : i32
    %c0_i32_0 = arith.constant 0 : i32
    %c0_i32_1 = arith.constant 0 : i32
    return %c0_i32, %arg0, %c0_i32_0 : i32, i32, i32
  }
  func.func @transform_2(%arg0: i32) -> (i32, i32) {
    %c0_i32 = arith.constant 0 : i32
    %c0_i32_0 = arith.constant 0 : i32
    %c0_i32_1 = arith.constant 0 : i32
    return %c0_i32, %c0_i32_0 : i32, i32
  }
  func.func @transform_3(%arg0: i32) -> (i32, i32) {
    %c0_i32 = arith.constant 0 : i32
    %c0_i32_0 = arith.constant 0 : i32
    %c0_i32_1 = arith.constant 0 : i32
    return %c0_i32, %c0_i32_0 : i32, i32
  }
  func.func @transform_4(%arg0: i32) -> (i32, i32) {
    %c0_i32 = arith.constant 0 : i32
    %c0_i32_0 = arith.constant 0 : i32
    %c0_i32_1 = arith.constant 0 : i32
    return %c0_i32, %c0_i32_0 : i32, i32
  }
  func.func @transform_5(%arg0: i32) -> (i32, i32) {
    %c0_i32 = arith.constant 0 : i32
    %c0_i32_0 = arith.constant 0 : i32
    return %arg0, %c0_i32 : i32, i32
  }
}

</mosaic_0001>

<llo_original>
// kernel: tpu_custom_call.1
$region0: #{tpu_custom_call.1}
  #allocation0 [shape = 'u32[]', space=smem, size = 0x4, offset = 0x4, fixed_abs, tag = 'smem constant byte address 0x4 - core index']
  #allocation1 [shape = 'u32[144,128]{1,0:T(1,128)}', space=vmem, size = 0x12000, scoped, tag = 'internal scratch']
  %s0 = inlined_call_operand.hbm [shape: f32[16,8,32], index: 0, kind: input, shape index: {}]
  %s1 = inlined_call_operand.hbm [shape: f32[2,16,32], index: 1, kind: input, shape index: {}]
  %s2 = inlined_call_operand.vmem [shape: bf16[32,16], index: 2, kind: input, shape index: {}]
  %s3 = inlined_call_operand.vmem [shape: f32[32,32], index: 3, kind: input, shape index: {}]
  %s4 = inlined_call_operand.vmem [shape: f32[1,16], index: 4, kind: input, shape index: {}]
  %s5 = inlined_call_operand.hbm [shape: f32[16,128], index: 5, kind: output, shape index: {}]
  %s6 = sld [smem:[#allocation0]]
  $region61: #{tpu_custom_call.1} parent=0
    _
  %s8 = ssub.s32 1, %s6
  %s9 = scalar_select 0, %s8, %s6
  $region1: #{tpu_custom_call.1} parent=0
    #allocation2 [shape = 'u8[65536]{0}', space=vmem, size = 0x10000, scoped, tag = 'input window, operand 0']
    #allocation3 [shape = 's32[2]{0}', space=sflag, size = 0x8, scoped, tag = 'scoped memory for tpu_custom_call.1']
    #allocation4 [shape = 's32[2]{0}', space=sflag, size = 0x8, scoped, tag = 'scoped memory for tpu_custom_call.1']
    #allocation5 [shape = 'u8[16384]{0}', space=vmem, size = 0x4000, scoped, tag = 'input window, operand 1']
    #allocation6 [shape = 's32[2]{0}', space=sflag, size = 0x8, scoped, tag = 'scoped memory for tpu_custom_call.1']
    #allocation7 [shape = 'u8[8192]{0}', space=vmem, size = 0x2000, scoped, tag = 'output window, operand 0']
    %10 = vsyncpa [#allocation3], 0
    %s11 = scalar_lea.sflag [#allocation3], 1
    %12 = vsyncpa %s11, 0
    %13 = vsyncpa [#allocation6], 0
    %s14 = scalar_lea.sflag [#allocation6], 1
    %15 = vsyncpa %s14, 0
    %16 = vsyncpa [#allocation4], 0
    %s17 = scalar_lea.sflag [#allocation4], 1
    %18 = vsyncpa %s17, 0
    loop: start=0, step=1, limit=4
    $region2: #{tpu_custom_call.1} parent=1 // loop_pre_header
      _
    $region3: #{tpu_custom_call.1} parent=1 // loop_header
      %s20 = sphi 0, %s24
      %p21 = scmp.ge.s32.totalorder %s20, 4
      %s30 = sphi 0, %s32
      %s33 = sphi 0, %s30
      %s34 = sphi 0, %s33
      %s50 = sphi 0, %s34
      %s56 = sphi 0, %s58
      %s59 = sphi 0, %s56
      %s60 = sphi 0, %s59
      %s76 = sphi 0, %s60
      %s80 = sphi 0, %s80
      %s82 = sphi 0, %s80
      %s83 = sphi 0, %s82
      %s97 = sphi 0, %s83
      %s101 = sphi 0, %s101
      %s103 = sphi 0, %s101
      %s104 = sphi 0, %s103
      %s118 = sphi 0, %s104
      %s122 = sphi 0, %s122
      %s124 = sphi 0, %s122
      %s125 = sphi 0, %s124
      %s139 = sphi 0, %s125
      %s145 = sphi 0, %s147
      %s148 = sphi 0, %s145
      %s149 = sphi 0, %s148
      %s165 = sphi 0, %s149
    $region4: #{tpu_custom_call.1} parent=1 // loop_header_branch
      %23 = sbr.rel (%p21) target = $region8
    $region5: #{tpu_custom_call.1} parent=1 // loop_body
      %s25 = ssub.s32 %s20, 1
      %s26 = ssub.s32 %s20, 2
      %s27 = sadd.s32 %s20, 1
      %s28 = ssub.s32 %s20, %s27
      %p29 = scmp.eq.s32.totalorder %s28, 0
      %s31 = sadd.s32 %s30, 1
      %s32 = scalar_select %p29, %s30, %s31
      %p35 = pneg %p29
      %p36 = scmp.eq.s32.totalorder %s20, 1
      %p37 = por %p35, %p36
      %p38 = scmp.ne.s32.totalorder %s30, %s33
      %p39 = scmp.eq.s32.totalorder %s20, 0
      %p40 = por %p38, %p39
      %p41 = scmp.ne.s32.totalorder %s30, %s33
      %p42 = scmp.eq.s32.totalorder %s25, 1
      %p43 = por %p41, %p42
      %p44 = scmp.ne.s32.totalorder %s33, %s34
      %p45 = scmp.eq.s32.totalorder %s25, 0
      %p46 = por %p44, %p45
      %p47 = scmp.ne.s32.totalorder %s33, %s34
      %p48 = scmp.eq.s32.totalorder %s26, 1
      %p49 = por %p47, %p48
      %p51 = scmp.ne.s32.totalorder %s34, %s50
      %p52 = scmp.eq.s32.totalorder %s26, 0
      %p53 = por %p51, %p52
      %s54 = ssub.s32 %s20, %s27
      %p55 = scmp.eq.s32.totalorder %s54, 0
      %s57 = sadd.s32 %s56, 1
      %s58 = scalar_select %p55, %s56, %s57
      %p61 = pneg %p55
      %p62 = scmp.eq.s32.totalorder %s20, 1
      %p63 = por %p61, %p62
      %p64 = scmp.ne.s32.totalorder %s56, %s59
      %p65 = scmp.eq.s32.totalorder %s20, 0
      %p66 = por %p64, %p65
      %p67 = scmp.ne.s32.totalorder %s56, %s59
      %p68 = scmp.eq.s32.totalorder %s25, 1
      %p69 = por %p67, %p68
      %p70 = scmp.ne.s32.totalorder %s59, %s60
      %p71 = scmp.eq.s32.totalorder %s25, 0
      %p72 = por %p70, %p71
      %p73 = scmp.ne.s32.totalorder %s59, %s60
      %p74 = scmp.eq.s32.totalorder %s26, 1
      %p75 = por %p73, %p74
      %p77 = scmp.ne.s32.totalorder %s60, %s76
      %p78 = scmp.eq.s32.totalorder %s26, 0
      %p79 = por %p77, %p78
      %s81 = sadd.s32 %s80, 1
      %p84 = scmp.eq.s32.totalorder %s20, 1
      %p85 = scmp.ne.s32.totalorder %s80, %s82
      %p86 = scmp.eq.s32.totalorder %s20, 0
      %p87 = por %p85, %p86
      %p88 = scmp.ne.s32.totalorder %s80, %s82
      %p89 = scmp.eq.s32.totalorder %s25, 1
      %p90 = por %p88, %p89
      %p91 = scmp.ne.s32.totalorder %s82, %s83
      %p92 = scmp.eq.s32.totalorder %s25, 0
      %p93 = por %p91, %p92
      %p94 = scmp.ne.s32.totalorder %s82, %s83
      %p95 = scmp.eq.s32.totalorder %s26, 1
      %p96 = por %p94, %p95
      %p98 = scmp.ne.s32.totalorder %s83, %s97
      %p99 = scmp.eq.s32.totalorder %s26, 0
      %p100 = por %p98, %p99
      %s102 = sadd.s32 %s101, 1
      %p105 = scmp.eq.s32.totalorder %s20, 1
      %p106 = scmp.ne.s32.totalorder %s101, %s103
      %p107 = scmp.eq.s32.totalorder %s20, 0
      %p108 = por %p106, %p107
      %p109 = scmp.ne.s32.totalorder %s101, %s103
      %p110 = scmp.eq.s32.totalorder %s25, 1
      %p111 = por %p109, %p110
      %p112 = scmp.ne.s32.totalorder %s103, %s104
      %p113 = scmp.eq.s32.totalorder %s25, 0
      %p114 = por %p112, %p113
      %p115 = scmp.ne.s32.totalorder %s103, %s104
      %p116 = scmp.eq.s32.totalorder %s26, 1
      %p117 = por %p115, %p116
      %p119 = scmp.ne.s32.totalorder %s104, %s118
      %p120 = scmp.eq.s32.totalorder %s26, 0
      %p121 = por %p119, %p120
      %s123 = sadd.s32 %s122, 1
      %p126 = scmp.eq.s32.totalorder %s20, 1
      %p127 = scmp.ne.s32.totalorder %s122, %s124
      %p128 = scmp.eq.s32.totalorder %s20, 0
      %p129 = por %p127, %p128
      %p130 = scmp.ne.s32.totalorder %s122, %s124
      %p131 = scmp.eq.s32.totalorder %s25, 1
      %p132 = por %p130, %p131
      %p133 = scmp.ne.s32.totalorder %s124, %s125
      %p134 = scmp.eq.s32.totalorder %s25, 0
      %p135 = por %p133, %p134
      %p136 = scmp.ne.s32.totalorder %s124, %s125
      %p137 = scmp.eq.s32.totalorder %s26, 1
      %p138 = por %p136, %p137
      %p140 = scmp.ne.s32.totalorder %s125, %s139
      %p141 = scmp.eq.s32.totalorder %s26, 0
      %p142 = por %p140, %p141
      %s143 = ssub.s32 %s20, %s27
      %p144 = scmp.eq.s32.totalorder %s143, 0
      %s146 = sadd.s32 %s145, 1
      %s147 = scalar_select %p144, %s145, %s146
      %p150 = pneg %p144
      %p151 = scmp.eq.s32.totalorder %s20, 1
      %p152 = por %p150, %p151
      %p153 = scmp.ne.s32.totalorder %s145, %s148
      %p154 = scmp.eq.s32.totalorder %s20, 0
      %p155 = por %p153, %p154
      %p156 = scmp.ne.s32.totalorder %s145, %s148
      %p157 = scmp.eq.s32.totalorder %s25, 1
      %p158 = por %p156, %p157
      %p159 = scmp.ne.s32.totalorder %s148, %s149
      %p160 = scmp.eq.s32.totalorder %s25, 0
      %p161 = por %p159, %p160
      %p162 = scmp.ne.s32.totalorder %s148, %s149
      %p163 = scmp.eq.s32.totalorder %s26, 1
      %p164 = por %p162, %p163
      %p166 = scmp.ne.s32.totalorder %s149, %s165
      %p167 = scmp.eq.s32.totalorder %s26, 0
      %p168 = por %p166, %p167
      %p169 = scmp.le.s32.totalorder 1, %s20
      %p170 = scmp.lt.s32.totalorder %s20, 3
      %p171 = pnand %p169, %p170
      %p172 = pneg %p171
      // Predicated region
      $region9: #{tpu_custom_call.1} parent=5 // pred_check
        _
      $region10: #{tpu_custom_call.1} parent=5 // pred_check_branch
        %174 = sbr.rel (%p171) target = $region12
      $region11: #{tpu_custom_call.1} parent=5 // pred_region
        %s175 = ssub.s32 %s20, 1
        // Predicated region
        $region13: #{tpu_custom_call.1} parent=11 // pred_check
          %p176 = pneg %p93
        $region14: #{tpu_custom_call.1} parent=11 // pred_check_branch
          %178 = sbr.rel (%p176) target = $region16
        $region15: #{tpu_custom_call.1} parent=11 // pred_region
          _
        $region16: #{tpu_custom_call.1} parent=11 // pred_fallthru
          _
        // Predicated region
        $region17: #{tpu_custom_call.1} parent=11 // pred_check
          %p179 = pneg %p114
        $region18: #{tpu_custom_call.1} parent=11 // pred_check_branch
          %181 = sbr.rel (%p179) target = $region20
        $region19: #{tpu_custom_call.1} parent=11 // pred_region
          _
        $region20: #{tpu_custom_call.1} parent=11 // pred_fallthru
          _
        // Predicated region
        $region21: #{tpu_custom_call.1} parent=11 // pred_check
          %p182 = pneg %p135
        $region22: #{tpu_custom_call.1} parent=11 // pred_check_branch
          %184 = sbr.rel (%p182) target = $region24
        $region23: #{tpu_custom_call.1} parent=11 // pred_region
          _
        $region24: #{tpu_custom_call.1} parent=11 // pred_fallthru
          _
      $region12: #{tpu_custom_call.1} parent=5 // pred_fallthru
        _
      %p185 = scmp.lt.s32.totalorder %s20, 2
      // Predicated region
      $region25: #{tpu_custom_call.1} parent=5 // pred_check
        %p186 = pneg %p185
      $region26: #{tpu_custom_call.1} parent=5 // pred_check_branch
        %188 = sbr.rel (%p186) target = $region28
      $region27: #{tpu_custom_call.1} parent=5 // pred_region
        // Predicated region
        $region29: #{tpu_custom_call.1} parent=27 // pred_check
          %p189 = pneg %p40
        $region30: #{tpu_custom_call.1} parent=27 // pred_check_branch
          %191 = sbr.rel (%p189) target = $region32
        $region31: #{tpu_custom_call.1} parent=27 // pred_region
          %s192 = sand.u32 %s30, 1
          %s193 = scalar_lea.sflag [#allocation3], %s192
          %s194 = sand.u32 %s30, 1
          %s195 = smul.addr %s194, 64
          %s196 = scalar_lea.vmem [#allocation2], %s195
          %s197 = smul.u32 8, %s20
          %s199 = ssub.s32 1024, 1024
          %200 = vsyncadd %s193, %s199
          %s201 = smul.addr %s197, 128
          %s202 = scalar_lea.hbm %s0, %s201
          %s203 = sshll.u32 %s196, 4
          %s204 = int_to_ptr.vmem [resolvable:$true] %s203
          %209 = dma.hbm_to_vmem [thread:$0]  %s202, 1024, %s204, %s193, 128, 128, 8
        $region32: #{tpu_custom_call.1} parent=27 // pred_fallthru
          _
        // Predicated region
        $region33: #{tpu_custom_call.1} parent=27 // pred_check
          %p210 = pneg %p66
        $region34: #{tpu_custom_call.1} parent=27 // pred_check_branch
          %212 = sbr.rel (%p210) target = $region36
        $region35: #{tpu_custom_call.1} parent=27 // pred_region
          %s213 = sand.u32 %s56, 1
          %s214 = scalar_lea.sflag [#allocation6], %s213
          %s215 = sand.u32 %s56, 1
          %s216 = smul.addr %s215, 16
          %s217 = scalar_lea.vmem [#allocation5], %s216
          %s219 = ssub.s32 256, 256
          %220 = vsyncadd %s214, %s219
          %s221 = smul.addr %s20, 128
          %s222 = scalar_lea.hbm %s1, %s221
          %s223 = sshll.u32 %s217, 4
          %s224 = int_to_ptr.vmem [resolvable:$true] %s223
          %229 = dma.hbm_to_vmem [thread:$0]  %s222, 256, %s224, %s214, 256, 128, 8
        $region36: #{tpu_custom_call.1} parent=27 // pred_fallthru
          _
      $region28: #{tpu_custom_call.1} parent=5 // pred_fallthru
        _
      %p230 = scmp.le.s32.totalorder 1, %s20
      %p231 = scmp.lt.s32.totalorder %s20, 3
      %p232 = pnand %p230, %p231
      %p233 = pneg %p232
      // Predicated region
      $region37: #{tpu_custom_call.1} parent=5 // pred_check
        _
      $region38: #{tpu_custom_call.1} parent=5 // pred_check_branch
        %235 = sbr.rel (%p232) target = $region40
      $region39: #{tpu_custom_call.1} parent=5 // pred_region
        %s236 = ssub.s32 %s20, 1
        %s237 = sand.u32 %s33, 1
        %s238 = scalar_lea.sflag [#allocation3], %s237
        %s239 = sand.u32 %s33, 1
        %s240 = smul.addr %s239, 64
        %s241 = scalar_lea.vmem [#allocation2], %s240
        // Predicated region
        $region41: #{tpu_custom_call.1} parent=39 // pred_check
          %p242 = pneg %p46
        $region42: #{tpu_custom_call.1} parent=39 // pred_check_branch
          %244 = sbr.rel (%p242) target = $region44
        $region43: #{tpu_custom_call.1} parent=39 // pred_region
          %245 = dma.done %s238, 1024
        $region44: #{tpu_custom_call.1} parent=39 // pred_fallthru
          _
        %s246 = sand.u32 %s59, 1
        %s247 = scalar_lea.sflag [#allocation6], %s246
        %s248 = sand.u32 %s59, 1
        %s249 = smul.addr %s248, 16
        %s250 = scalar_lea.vmem [#allocation5], %s249
        // Predicated region
        $region45: #{tpu_custom_call.1} parent=39 // pred_check
          %p251 = pneg %p72
        $region46: #{tpu_custom_call.1} parent=39 // pred_check_branch
          %253 = sbr.rel (%p251) target = $region48
        $region47: #{tpu_custom_call.1} parent=39 // pred_region
          %254 = dma.done %s247, 256
        $region48: #{tpu_custom_call.1} parent=39 // pred_fallthru
          _
        %s255 = sand.u32 %s33, 1
        %s256 = scalar_lea.sflag [#allocation3], %s255
        %s257 = sand.u32 %s33, 1
        %s258 = smul.addr %s257, 64
        %s259 = scalar_lea.vmem [#allocation2], %s258
        %p260 = pneg %p46
        %p261 = pneg %p43
        %s262 = sand.u32 %s59, 1
        %s263 = scalar_lea.sflag [#allocation6], %s262
        %s264 = sand.u32 %s59, 1
        %s265 = smul.addr %s264, 16
        %s266 = scalar_lea.vmem [#allocation5], %s265
        %p267 = pneg %p72
        %p268 = pneg %p69
        %p269 = pneg %p93
        %p270 = pneg %p90
        %p271 = pneg %p114
        %p272 = pneg %p111
        %p273 = pneg %p135
        %p274 = pneg %p132
        %p275 = pneg %p161
        %p276 = pneg %p158
        %s277 = sand.u32 %s148, 1
        %s278 = scalar_lea.sflag [#allocation4], %s277
        %s279 = sand.u32 %s148, 1
        %s280 = smul.addr %s279, 8
        %s281 = scalar_lea.vmem [#allocation7], %s280
        %s282 = smul.u32 8, %s25
        %v284 = vld [vmem:[%s241] sm:$0xff]
        %v285 = vld [vmem:[%s241 + $0x8] sm:$0xff]
        %v286 = vld [vmem:[%s241 + $0x10] sm:$0xff]
        %v287 = vld [vmem:[%s241 + $0x18] sm:$0xff]
        %v288 = vld [vmem:[%s241 + $0x20] sm:$0xff]
        %v289 = vld [vmem:[%s241 + $0x28] sm:$0xff]
        %v290 = vld [vmem:[%s241 + $0x30] sm:$0xff]
        %v291 = vld [vmem:[%s241 + $0x38] sm:$0xff]
        %v292 = vld [vmem:[%s250] sm:$0xff]
        %v293 = vld [vmem:[%s250 + $0x8] sm:$0xff]
        %v294 = vld [vmem:[%s4] sm:$0x1]
        %v295 = vpack.c.bf16 %v285, %v284
        %v296 = vpack.c.bf16 %v287, %v286
        %v297 = vpack.c.bf16 %v289, %v288
        %v298 = vpack.c.bf16 %v291, %v290
        %v299 = vld [vmem:[%s2] sm:$0xf]
        %v300 = vld [vmem:[%s2 + $0x4] sm:$0xf]
        %v301 = vld [vmem:[%s2 + $0x8] sm:$0xf]
        %v302 = vld [vmem:[%s2 + $0xc] sm:$0xf]
        %v307 = vunpack.c.l.b16 %v299
        %v308 = vunpack.c.l.b16 %v300
        %v309 = vunpack.c.l.b16 %v301
        %v310 = vunpack.c.l.b16 %v302
        %v311 = vpack.c.b16 %v308, %v307
        %v312 = vpack.c.b16 %v310, %v309
        %vm315 = vcmask 261120
        %v317 = vsel %vm315, %v295, 0
        %v320 = vsel %vm315, %v296, 0
        %v323 = vsel %vm315, %v297, 0
        %v326 = vsel %vm315, %v298, 0
        %328 = vmatprep.subr.bf16.mxu0 0
        %329 = vmatpush1.bf16.msra.mxu0 %v311
        %330 = vmatprep.subr.bf16.mxu0 0
        %331 = vmatpush1.bf16.msra.mxu0 %v312
        %332 = vmatprep.subr.bf16.mxu0 0
        %333 = vmatpush1.bf16.msra.mxu0 0
        %334 = vmatprep.subr.bf16.mxu0 0
        %335 = vmatpush1.bf16.msra.mxu0 0
        %336 = vmatprep.subr.bf16.mxu0 0
        %337 = vmatpush1.bf16.msra.mxu0 0
        %338 = vmatprep.subr.bf16.mxu0 0
        %339 = vmatpush1.bf16.msra.mxu0 0
        %340 = vmatprep.subr.bf16.mxu0 0
        %341 = vmatpush1.bf16.msra.mxu0 0
        %342 = vmatprep.subr.bf16.mxu0 0
        %343 = vmatpush1.bf16.msra.mxu0 0
        %344 = vmatprep.subr.bf16.mxu0 0
        %345 = vmatpush1.bf16.msra.mxu0 0
        %346 = vmatprep.subr.bf16.mxu0 0
        %347 = vmatpush1.bf16.msra.mxu0 0
        %348 = vmatprep.subr.bf16.mxu0 0
        %349 = vmatpush1.bf16.msra.mxu0 0
        %350 = vmatprep.subr.bf16.mxu0 0
        %351 = vmatpush1.bf16.msra.mxu0 0
        %352 = vmatprep.subr.bf16.mxu0 0
        %353 = vmatpush1.bf16.msra.mxu0 0
        %354 = vmatprep.subr.bf16.mxu0 0
        %355 = vmatpush1.bf16.msra.mxu0 0
        %356 = vmatprep.subr.bf16.mxu0 0
        %357 = vmatpush1.bf16.msra.mxu0 0
        %358 = vmatprep.subr.bf16.mxu0 0
        %359 = vmatpush1.bf16.msra.mxu0 0
        %360 = vmatprep.mubr.bf16.mxu0 0
        %361 = vmatmul.mubr.bf16.gmra.mrb[0].mxu0 %v317
        %v362 = vpop.f32.mrb[0].mxu0
        %v363 = vadd.f32 0.0, %v362
        %v364 = vpop.f32.mrb[0].mxu0
        %v365 = vpop.f32.mrb[0].mxu0
        %v366 = vadd.f32 0.0, %v365
        %v367 = vpop.f32.mrb[0].mxu0
        %368 = vmatprep.mubr.bf16.mxu0 0
        %369 = vmatmul.mubr.bf16.gmra.mrb[0].mxu0 %v320
        %v370 = vpop.f32.mrb[0].mxu0
        %v371 = vadd.f32 0.0, %v370
        %v372 = vpop.f32.mrb[0].mxu0
        %v373 = vpop.f32.mrb[0].mxu0
        %v374 = vadd.f32 0.0, %v373
        %v375 = vpop.f32.mrb[0].mxu0
        %376 = vmatprep.mubr.bf16.mxu0 0
        %377 = vmatmul.mubr.bf16.gmra.mrb[0].mxu0 %v323
        %v378 = vpop.f32.mrb[0].mxu0
        %v379 = vadd.f32 0.0, %v378
        %v380 = vpop.f32.mrb[0].mxu0
        %v381 = vpop.f32.mrb[0].mxu0
        %v382 = vadd.f32 0.0, %v381
        %v383 = vpop.f32.mrb[0].mxu0
        %384 = vmatprep.mubr.bf16.mxu0 0
        %385 = vmatmul.mubr.bf16.gmra.mrb[0].mxu0 %v326
        %v386 = vpop.f32.mrb[0].mxu0
        %v387 = vadd.f32 0.0, %v386
        %v388 = vpop.f32.mrb[0].mxu0
        %v389 = vpop.f32.mrb[0].mxu0
        %v390 = vadd.f32 0.0, %v389
        %v391 = vpop.f32.mrb[0].mxu0
        %392 = vdwg.mxu0
        %v393 = vld [vmem:[%s3] sm:$0xff]
        %v394 = vld [vmem:[%s3 + $0x8] sm:$0xff]
        %v395 = vld [vmem:[%s3 + $0x10] sm:$0xff]
        %v396 = vld [vmem:[%s3 + $0x18] sm:$0xff]
        %v398 = vsel %vm315, %v292, 0
        %v401 = vsel %vm315, %v293, 0
        %403 = vmatprep.subr.mxu0 0.0
        %404 = vmatpush1.msra.mxu0 %v393
        %405 = vmatprep.subr.mxu0 0.0
        %406 = vmatpush1.msra.mxu0 %v394
        %407 = vmatprep.subr.mxu0 0.0
        %408 = vmatpush1.msra.mxu0 %v395
        %409 = vmatprep.subr.mxu0 0.0
        %410 = vmatpush1.msra.mxu0 %v396
        %411 = vmatprep.subr.mxu0 0.0
        %412 = vmatpush1.msra.mxu0 0.0
        %413 = vmatprep.subr.mxu0 0.0
        %414 = vmatpush1.msra.mxu0 0.0
        %415 = vmatprep.subr.mxu0 0.0
        %416 = vmatpush1.msra.mxu0 0.0
        %417 = vmatprep.subr.mxu0 0.0
        %418 = vmatpush1.msra.mxu0 0.0
        %419 = vmatprep.subr.mxu0 0.0
        %420 = vmatpush1.msra.mxu0 0.0
        %421 = vmatprep.subr.mxu0 0.0
        %422 = vmatpush1.msra.mxu0 0.0
        %423 = vmatprep.subr.mxu0 0.0
        %424 = vmatpush1.msra.mxu0 0.0
        %425 = vmatprep.subr.mxu0 0.0
        %426 = vmatpush1.msra.mxu0 0.0
        %427 = vmatprep.subr.mxu0 0.0
        %428 = vmatpush1.msra.mxu0 0.0
        %429 = vmatprep.subr.mxu0 0.0
        %430 = vmatpush1.msra.mxu0 0.0
        %431 = vmatprep.subr.mxu0 0.0
        %432 = vmatpush1.msra.mxu0 0.0
        %433 = vmatprep.subr.mxu0 0.0
        %434 = vmatpush1.msra.mxu0 0.0
        %435 = vmatprep.subr.mxu0 0.0
        %436 = vmatpush1.msra.mxu0 0.0
        %437 = vmatprep.subr.mxu0 0.0
        %438 = vmatpush1.msra.mxu0 0.0
        %439 = vmatprep.subr.mxu0 0.0
        %440 = vmatpush1.msra.mxu0 0.0
        %441 = vmatprep.subr.mxu0 0.0
        %442 = vmatpush1.msra.mxu0 0.0
        %443 = vmatprep.subr.mxu0 0.0
        %444 = vmatpush1.msra.mxu0 0.0
        %445 = vmatprep.subr.mxu0 0.0
        %446 = vmatpush1.msra.mxu0 0.0
        %447 = vmatprep.subr.mxu0 0.0
        %448 = vmatpush1.msra.mxu0 0.0
        %449 = vmatprep.subr.mxu0 0.0
        %450 = vmatpush1.msra.mxu0 0.0
        %451 = vmatprep.subr.mxu0 0.0
        %452 = vmatpush1.msra.mxu0 0.0
        %453 = vmatprep.subr.mxu0 0.0
        %454 = vmatpush1.msra.mxu0 0.0
        %455 = vmatprep.subr.mxu0 0.0
        %456 = vmatpush1.msra.mxu0 0.0
        %457 = vmatprep.subr.mxu0 0.0
        %458 = vmatpush1.msra.mxu0 0.0
        %459 = vmatprep.subr.mxu0 0.0
        %460 = vmatpush1.msra.mxu0 0.0
        %461 = vmatprep.subr.mxu0 0.0
        %462 = vmatpush1.msra.mxu0 0.0
        %463 = vmatprep.subr.mxu0 0.0
        %464 = vmatpush1.msra.mxu0 0.0
        %465 = vmatprep.subr.mxu0 0.0
        %466 = vmatpush1.msra.mxu0 0.0
        %467 = vmatprep.mubr.f32.mxu0 0.0
        %468 = vmatmul.mubr.f32.gmra.mrb[0].mxu0 %v398
        %v469 = vpop.f32.mrb[0].mxu0
        %v470 = vadd.f32 0.0, %v469
        %v471 = vpop.f32.mrb[0].mxu0
        %472 = vmatprep.mubr.f32.mxu0 0.0
        %473 = vmatmul.mubr.f32.gmra.mrb[0].mxu0 %v401
        %v474 = vpop.f32.mrb[0].mxu0
        %v475 = vadd.f32 0.0, %v474
        %v476 = vpop.f32.mrb[0].mxu0
        %477 = vdwg.mxu0
        %v479 = vcombine.high %v470, %v470
        %v481 = vunpack.c.l.s4 1966171168
        %v482 = vunpack.c.0.s8 %v481
        %v483 = vlaneseq
        %v484 = vshrl.u32 %v483, 7
        %v485 = vsub.s32 %v482, %v484
        %v486 = vrot.slane %v470, %v485
        %v488 = vunpack.c.l.s4 1966171168
        %v489 = vunpack.c.0.s8 %v488
        %v490 = vlaneseq
        %v491 = vshrl.u32 %v490, 7
        %v492 = vsub.s32 %v489, %v491
        %v493 = vrot.slane %v479, %v492
        %v494 = vcombine.high %v486, %v486
        %v495 = vcombine.high %v493, %v493
        %v497 = vunpack.c.l.s4 1966171168
        %v498 = vunpack.c.0.s8 %v497
        %v499 = vlaneseq
        %v500 = vshrl.u32 %v499, 7
        %v501 = vsub.s32 %v498, %v500
        %v502 = vrot.slane %v486, %v501
        %v504 = vunpack.c.l.s4 1966171168
        %v505 = vunpack.c.0.s8 %v504
        %v506 = vlaneseq
        %v507 = vshrl.u32 %v506, 7
        %v508 = vsub.s32 %v505, %v507
        %v509 = vrot.slane %v493, %v508
        %v511 = vunpack.c.l.s4 1966171168
        %v512 = vunpack.c.0.s8 %v511
        %v513 = vlaneseq
        %v514 = vshrl.u32 %v513, 7
        %v515 = vsub.s32 %v512, %v514
        %v516 = vrot.slane %v494, %v515
        %v518 = vunpack.c.l.s4 1966171168
        %v519 = vunpack.c.0.s8 %v518
        %v520 = vlaneseq
        %v521 = vshrl.u32 %v520, 7
        %v522 = vsub.s32 %v519, %v521
        %v523 = vrot.slane %v495, %v522
        %v524 = vcombine.high %v502, %v502
        %v525 = vcombine.high %v509, %v509
        %v526 = vcombine.high %v516, %v516
        %v527 = vcombine.high %v523, %v523
        %v528 = vlaneseq
        %v529 = vshrl.u32 %v528, 7
        %v530 = vsub.s32 0, %v529
        %v531 = vrot.slane %v502, %v530
        %v532 = vlaneseq
        %v533 = vshrl.u32 %v532, 7
        %v534 = vsub.s32 0, %v533
        %v535 = vrot.slane %v516, %v534
        %v536 = vlaneseq
        %v537 = vshrl.u32 %v536, 7
        %v538 = vsub.s32 0, %v537
        %v539 = vrot.slane %v524, %v538
        %v540 = vlaneseq
        %v541 = vshrl.u32 %v540, 7
        %v542 = vsub.s32 0, %v541
        %v543 = vrot.slane %v526, %v542
        %v544 = vlaneseq
        %v545 = vshrl.u32 %v544, 7
        %v546 = vsub.s32 0, %v545
        %v547 = vrot.slane %v509, %v546
        %v548 = vlaneseq
        %v549 = vshrl.u32 %v548, 7
        %v550 = vsub.s32 0, %v549
        %v551 = vrot.slane %v523, %v550
        %v552 = vlaneseq
        %v553 = vshrl.u32 %v552, 7
        %v554 = vsub.s32 0, %v553
        %v555 = vrot.slane %v525, %v554
        %v556 = vlaneseq
        %v557 = vshrl.u32 %v556, 7
        %v558 = vsub.s32 0, %v557
        %v559 = vrot.slane %v527, %v558
        %v568 = vadd.f32 %v363, %v531
        %v569 = vadd.f32 %v366, %v535
        %v570 = vadd.f32 %v371, %v539
        %v571 = vadd.f32 %v374, %v543
        %v572 = vadd.f32 %v379, %v547
        %v573 = vadd.f32 %v382, %v551
        %v574 = vadd.f32 %v387, %v555
        %v575 = vadd.f32 %v390, %v559
        %v576 = vtanh.pop %v568
        %v577 = vtanh.pop %v569
        %v578 = vtanh.pop %v570
        %v579 = vtanh.pop %v571
        %v580 = vtanh.pop %v572
        %v581 = vtanh.pop %v573
        %v582 = vtanh.pop %v574
        %v583 = vtanh.pop %v575
        %v585 = vlaneseq
        %v586 = vshrl.u32 %v585, 7
        %v587 = vsub.s32 0, %v586
        %v588 = vrot.slane %v294, %v587
        %v590 = vmul.f32 %v576, %v588
        %v591 = vmul.f32 %v577, %v588
        %v592 = vmul.f32 %v578, %v588
        %v593 = vmul.f32 %v579, %v588
        %v594 = vmul.f32 %v580, %v588
        %v595 = vmul.f32 %v581, %v588
        %v596 = vmul.f32 %v582, %v588
        %v597 = vmul.f32 %v583, %v588
        %vm598 = vcmask 130048
        %v599 = vsel %vm598, %v590, 0.0
        %600 = vadd.xlane.f32.xlu0 %v599
        %v601 = vpop.xlane.xlu0 %600
        %v602 = vsel %vm598, %v591, 0.0
        %603 = vadd.xlane.f32.xlu0 %v602
        %v604 = vpop.xlane.xlu0 %603
        %v605 = vsel %vm598, %v592, 0.0
        %606 = vadd.xlane.f32.xlu0 %v605
        %v607 = vpop.xlane.xlu0 %606
        %v608 = vsel %vm598, %v593, 0.0
        %609 = vadd.xlane.f32.xlu0 %v608
        %v610 = vpop.xlane.xlu0 %609
        %v611 = vsel %vm598, %v594, 0.0
        %612 = vadd.xlane.f32.xlu0 %v611
        %v613 = vpop.xlane.xlu0 %612
        %v614 = vsel %vm598, %v595, 0.0
        %615 = vadd.xlane.f32.xlu0 %v614
        %v616 = vpop.xlane.xlu0 %615
        %v617 = vsel %vm598, %v596, 0.0
        %618 = vadd.xlane.f32.xlu0 %v617
        %v619 = vpop.xlane.xlu0 %618
        %v620 = vsel %vm598, %v597, 0.0
        %621 = vadd.xlane.f32.xlu0 %v620
        %v622 = vpop.xlane.xlu0 %621
        %624 = vrot.lane.b32.xlu0 %v475, 112
        %v625 = vpop.permute.xlu0 %624
        %v627 = vadd.f32 %v470, %v625
        %v628 = vtanh.pop %v627
        %v629 = vmul.f32 %v628, %v588
        %v630 = vsel %vm598, %v629, 0.0
        %631 = vadd.xlane.f32.xlu0 %v630
        %v632 = vpop.xlane.xlu0 %631
        %v641 = vlaneseq
        %v642 = vand.u32 %v641, 127
        %v643 = vlaneseq
        %v644 = vshrl.u32 %v643, 7
        %v645 = vsub.s32 %v642, %v644
        %v646 = vrot.slane %v601, %v645
        %v647 = vlaneseq
        %v648 = vshrl.u32 %v647, 7
        %v649 = vsub.s32 %v642, %v648
        %v650 = vrot.slane %v604, %v649
        %v651 = vlaneseq
        %v652 = vshrl.u32 %v651, 7
        %v653 = vsub.s32 %v642, %v652
        %v654 = vrot.slane %v607, %v653
        %v655 = vlaneseq
        %v656 = vshrl.u32 %v655, 7
        %v657 = vsub.s32 %v642, %v656
        %v658 = vrot.slane %v610, %v657
        %v659 = vlaneseq
        %v660 = vshrl.u32 %v659, 7
        %v661 = vsub.s32 %v642, %v660
        %v662 = vrot.slane %v613, %v661
        %v663 = vlaneseq
        %v664 = vshrl.u32 %v663, 7
        %v665 = vsub.s32 %v642, %v664
        %v666 = vrot.slane %v616, %v665
        %v667 = vlaneseq
        %v668 = vshrl.u32 %v667, 7
        %v669 = vsub.s32 %v642, %v668
        %v670 = vrot.slane %v619, %v669
        %v671 = vlaneseq
        %v672 = vshrl.u32 %v671, 7
        %v673 = vsub.s32 %v642, %v672
        %v674 = vrot.slane %v622, %v673
        %vm675 = vcmask 1041409
        %v676 = vsel %vm675, %v650, %v646
        %vm677 = vcmask 1042434
        %v678 = vsel %vm677, %v654, %v676
        %vm679 = vcmask 1043459
        %v680 = vsel %vm679, %v658, %v678
        %vm681 = vcmask 1044484
        %v682 = vsel %vm681, %v662, %v680
        %vm683 = vcmask 1045509
        %v684 = vsel %vm683, %v666, %v682
        %vm685 = vcmask 1046534
        %v686 = vsel %vm685, %v670, %v684
        %vm687 = vcmask 1047559
        %v688 = vsel %vm687, %v674, %v686
        %vm690 = vcmask 64512
        %v691 = vsel %vm690, %v688, -inf
        %692 = vmax.xlane.f32.xlu0 %v691
        %v693 = vpop.xlane.xlu0 %692
        %v694 = vmax.f32 %v693, %v632
        %v696 = vlaneseq
        %v697 = vshrl.u32 %v696, 7
        %v698 = vsub.s32 0, %v697
        %v699 = vrot.slane %v694, %v698
        %v700 = vlaneseq
        %v701 = vshrl.u32 %v700, 7
        %v702 = vsub.s32 1, %v701
        %v703 = vrot.slane %v694, %v702
        %v704 = vlaneseq
        %v705 = vshrl.u32 %v704, 7
        %v706 = vsub.s32 2, %v705
        %v707 = vrot.slane %v694, %v706
        %v708 = vlaneseq
        %v709 = vshrl.u32 %v708, 7
        %v710 = vsub.s32 3, %v709
        %v711 = vrot.slane %v694, %v710
        %v712 = vlaneseq
        %v713 = vshrl.u32 %v712, 7
        %v714 = vsub.s32 4, %v713
        %v715 = vrot.slane %v694, %v714
        %v716 = vlaneseq
        %v717 = vshrl.u32 %v716, 7
        %v718 = vsub.s32 5, %v717
        %v719 = vrot.slane %v694, %v718
        %v720 = vlaneseq
        %v721 = vshrl.u32 %v720, 7
        %v722 = vsub.s32 6, %v721
        %v723 = vrot.slane %v694, %v722
        %v724 = vlaneseq
        %v725 = vshrl.u32 %v724, 7
        %v726 = vsub.s32 7, %v725
        %v727 = vrot.slane %v694, %v726
        %v736 = vsub.f32 %v601, %v699
        %v737 = vsub.f32 %v604, %v703
        %v738 = vsub.f32 %v607, %v707
        %v739 = vsub.f32 %v610, %v711
        %v740 = vsub.f32 %v613, %v715
        %v741 = vsub.f32 %v616, %v719
        %v742 = vsub.f32 %v619, %v723
        %v743 = vsub.f32 %v622, %v727
        %v744 = vmul.f32 %v736, 1.442695
        %v745 = vpow.pop %v744
        %v746 = vmul.f32 %v737, 1.442695
        %v747 = vpow.pop %v746
        %v748 = vmul.f32 %v738, 1.442695
        %v749 = vpow.pop %v748
        %v750 = vmul.f32 %v739, 1.442695
        %v751 = vpow.pop %v750
        %v752 = vmul.f32 %v740, 1.442695
        %v753 = vpow.pop %v752
        %v754 = vmul.f32 %v741, 1.442695
        %v755 = vpow.pop %v754
        %v756 = vmul.f32 %v742, 1.442695
        %v757 = vpow.pop %v756
        %v758 = vmul.f32 %v743, 1.442695
        %v759 = vpow.pop %v758
        %v760 = vsub.f32 %v632, %v694
        %v761 = vmul.f32 %v760, 1.442695
        %v762 = vpow.pop %v761
        %771 = vset.pattern.permute.xlu0 0
        %772 = vperm.xlu0 %771, %v745
        %v773 = vpop.permute.xlu0 %772
        %774 = vset.pattern.permute.xlu0 0
        %775 = vperm.xlu0 %774, %v747
        %v776 = vpop.permute.xlu0 %775
        %777 = vset.pattern.permute.xlu0 0
        %778 = vperm.xlu0 %777, %v749
        %v779 = vpop.permute.xlu0 %778
        %780 = vset.pattern.permute.xlu0 0
        %781 = vperm.xlu0 %780, %v751
        %v782 = vpop.permute.xlu0 %781
        %783 = vset.pattern.permute.xlu0 0
        %784 = vperm.xlu0 %783, %v753
        %v785 = vpop.permute.xlu0 %784
        %786 = vset.pattern.permute.xlu0 0
        %787 = vperm.xlu0 %786, %v755
        %v788 = vpop.permute.xlu0 %787
        %789 = vset.pattern.permute.xlu0 0
        %790 = vperm.xlu0 %789, %v757
        %v791 = vpop.permute.xlu0 %790
        %792 = vset.pattern.permute.xlu0 0
        %793 = vperm.xlu0 %792, %v759
        %v794 = vpop.permute.xlu0 %793
        %v795 = vlaneseq
        %v796 = vshrl.u32 %v795, 7
        %v797 = vsub.s32 %v642, %v796
        %v798 = vrot.slane %v773, %v797
        %v799 = vlaneseq
        %v800 = vshrl.u32 %v799, 7
        %v801 = vsub.s32 %v642, %v800
        %v802 = vrot.slane %v776, %v801
        %v803 = vlaneseq
        %v804 = vshrl.u32 %v803, 7
        %v805 = vsub.s32 %v642, %v804
        %v806 = vrot.slane %v779, %v805
        %v807 = vlaneseq
        %v808 = vshrl.u32 %v807, 7
        %v809 = vsub.s32 %v642, %v808
        %v810 = vrot.slane %v782, %v809
        %v811 = vlaneseq
        %v812 = vshrl.u32 %v811, 7
        %v813 = vsub.s32 %v642, %v812
        %v814 = vrot.slane %v785, %v813
        %v815 = vlaneseq
        %v816 = vshrl.u32 %v815, 7
        %v817 = vsub.s32 %v642, %v816
        %v818 = vrot.slane %v788, %v817
        %v819 = vlaneseq
        %v820 = vshrl.u32 %v819, 7
        %v821 = vsub.s32 %v642, %v820
        %v822 = vrot.slane %v791, %v821
        %v823 = vlaneseq
        %v824 = vshrl.u32 %v823, 7
        %v825 = vsub.s32 %v642, %v824
        %v826 = vrot.slane %v794, %v825
        %v827 = vsel %vm675, %v802, %v798
        %v828 = vsel %vm677, %v806, %v827
        %v829 = vsel %vm679, %v810, %v828
        %v830 = vsel %vm681, %v814, %v829
        %v831 = vsel %vm683, %v818, %v830
        %v832 = vsel %vm685, %v822, %v831
        %v833 = vsel %vm687, %v826, %v832
        %v835 = vsel %vm690, %v833, 0.0
        %836 = vadd.xlane.f32.xlu0 %v835
        %v837 = vpop.xlane.xlu0 %836
        %v838 = vrcp.pop %v837
        %v840 = vlaneseq
        %v841 = vshrl.u32 %v840, 7
        %v842 = vsub.s32 0, %v841
        %v843 = vrot.slane %v838, %v842
        %v844 = vlaneseq
        %v845 = vshrl.u32 %v844, 7
        %v846 = vsub.s32 1, %v845
        %v847 = vrot.slane %v838, %v846
        %v848 = vlaneseq
        %v849 = vshrl.u32 %v848, 7
        %v850 = vsub.s32 2, %v849
        %v851 = vrot.slane %v838, %v850
        %v852 = vlaneseq
        %v853 = vshrl.u32 %v852, 7
        %v854 = vsub.s32 3, %v853
        %v855 = vrot.slane %v838, %v854
        %v856 = vlaneseq
        %v857 = vshrl.u32 %v856, 7
        %v858 = vsub.s32 4, %v857
        %v859 = vrot.slane %v838, %v858
        %v860 = vlaneseq
        %v861 = vshrl.u32 %v860, 7
        %v862 = vsub.s32 5, %v861
        %v863 = vrot.slane %v838, %v862
        %v864 = vlaneseq
        %v865 = vshrl.u32 %v864, 7
        %v866 = vsub.s32 6, %v865
        %v867 = vrot.slane %v838, %v866
        %v868 = vlaneseq
        %v869 = vshrl.u32 %v868, 7
        %v870 = vsub.s32 7, %v869
        %v871 = vrot.slane %v838, %v870
        %v880 = vmul.f32 %v745, %v843
        %v881 = vmul.f32 %v747, %v847
        %v882 = vmul.f32 %v749, %v851
        %v883 = vmul.f32 %v751, %v855
        %v884 = vmul.f32 %v753, %v859
        %v885 = vmul.f32 %v755, %v863
        %v886 = vmul.f32 %v757, %v867
        %v887 = vmul.f32 %v759, %v871
        %v888 = vadd.f32 %v837, %v762
        %v889 = vrcp.pop %v888
        %v890 = vmul.f32 %v762, %v889
        %892 = vset.pattern.permute.xlu0 0
        %893 = vperm.xlu0 %892, %v880
        %v894 = vpop.permute.xlu0 %893
        %897 = vset.pattern.permute.xlu0 0
        %898 = vperm.xlu0 %897, %v881
        %v899 = vpop.permute.xlu0 %898
        %902 = vset.pattern.permute.xlu0 0
        %903 = vperm.xlu0 %902, %v882
        %v904 = vpop.permute.xlu0 %903
        %907 = vset.pattern.permute.xlu0 0
        %908 = vperm.xlu0 %907, %v883
        %v909 = vpop.permute.xlu0 %908
        %912 = vset.pattern.permute.xlu0 0
        %913 = vperm.xlu0 %912, %v884
        %v914 = vpop.permute.xlu0 %913
        %917 = vset.pattern.permute.xlu0 0
        %918 = vperm.xlu0 %917, %v885
        %v919 = vpop.permute.xlu0 %918
        %922 = vset.pattern.permute.xlu0 0
        %923 = vperm.xlu0 %922, %v886
        %v924 = vpop.permute.xlu0 %923
        %927 = vset.pattern.permute.xlu0 0
        %928 = vperm.xlu0 %927, %v887
        %v929 = vpop.permute.xlu0 %928
        %v931 = vmul.f32 %v284, %v894
        %v932 = vmul.f32 %v285, %v899
        %v933 = vmul.f32 %v286, %v904
        %v934 = vmul.f32 %v287, %v909
        %v935 = vmul.f32 %v288, %v914
        %v936 = vmul.f32 %v289, %v919
        %v937 = vmul.f32 %v290, %v924
        %v938 = vmul.f32 %v291, %v929
        %v939 = vsel %vm315, %v931, 0.0
        %v940 = vrot.slane %v939, 4
        %v941 = vadd.f32 %v939, %v940
        %v942 = vrot.slane %v941, 2
        %v943 = vadd.f32 %v941, %v942
        %v944 = vrot.slane %v943, 1
        %v945 = vadd.f32 %v943, %v944
        %v946 = vsel %vm315, %v932, 0.0
        %v947 = vrot.slane %v946, 4
        %v948 = vadd.f32 %v946, %v947
        %v949 = vrot.slane %v948, 2
        %v950 = vadd.f32 %v948, %v949
        %v951 = vrot.slane %v950, 1
        %v952 = vadd.f32 %v950, %v951
        %v953 = vsel %vm315, %v933, 0.0
        %v954 = vrot.slane %v953, 4
        %v955 = vadd.f32 %v953, %v954
        %v956 = vrot.slane %v955, 2
        %v957 = vadd.f32 %v955, %v956
        %v958 = vrot.slane %v957, 1
        %v959 = vadd.f32 %v957, %v958
        %v960 = vsel %vm315, %v934, 0.0
        %v961 = vrot.slane %v960, 4
        %v962 = vadd.f32 %v960, %v961
        %v963 = vrot.slane %v962, 2
        %v964 = vadd.f32 %v962, %v963
        %v965 = vrot.slane %v964, 1
        %v966 = vadd.f32 %v964, %v965
        %v967 = vsel %vm315, %v935, 0.0
        %v968 = vrot.slane %v967, 4
        %v969 = vadd.f32 %v967, %v968
        %v970 = vrot.slane %v969, 2
        %v971 = vadd.f32 %v969, %v970
        %v972 = vrot.slane %v971, 1
        %v973 = vadd.f32 %v971, %v972
        %v974 = vsel %vm315, %v936, 0.0
        %v975 = vrot.slane %v974, 4
        %v976 = vadd.f32 %v974, %v975
        %v977 = vrot.slane %v976, 2
        %v978 = vadd.f32 %v976, %v977
        %v979 = vrot.slane %v978, 1
        %v980 = vadd.f32 %v978, %v979
        %v981 = vsel %vm315, %v937, 0.0
        %v982 = vrot.slane %v981, 4
        %v983 = vadd.f32 %v981, %v982
        %v984 = vrot.slane %v983, 2
        %v985 = vadd.f32 %v983, %v984
        %v986 = vrot.slane %v985, 1
        %v987 = vadd.f32 %v985, %v986
        %v988 = vsel %vm315, %v938, 0.0
        %v989 = vrot.slane %v988, 4
        %v990 = vadd.f32 %v988, %v989
        %v991 = vrot.slane %v990, 2
        %v992 = vadd.f32 %v990, %v991
        %v993 = vrot.slane %v992, 1
        %v994 = vadd.f32 %v992, %v993
        %v995 = vmul.f32 %v890, %v293
        %v996 = vsub.f32 1.0, %v890
        %v1005 = vsel %vm675, %v952, %v945
        %v1006 = vsel %vm677, %v959, %v1005
        %v1007 = vsel %vm679, %v966, %v1006
        %v1008 = vsel %vm681, %v973, %v1007
        %v1009 = vsel %vm683, %v980, %v1008
        %v1010 = vsel %vm685, %v987, %v1009
        %v1011 = vsel %vm687, %v994, %v1010
        %v1013 = vmul.f32 %v996, %v1011
        %v1014 = vadd.f32 %v995, %v1013
        %v1015 = vlaneseq
        %v1016 = vshrl.u32 %v1015, 7
        %v1017 = vsub.s32 %v642, %v1016
        %v1018 = vrot.slane %v894, %v1017
        %v1019 = vlaneseq
        %v1020 = vshrl.u32 %v1019, 7
        %v1021 = vsub.s32 %v642, %v1020
        %v1022 = vrot.slane %v899, %v1021
        %v1023 = vlaneseq
        %v1024 = vshrl.u32 %v1023, 7
        %v1025 = vsub.s32 %v642, %v1024
        %v1026 = vrot.slane %v904, %v1025
        %v1027 = vlaneseq
        %v1028 = vshrl.u32 %v1027, 7
        %v1029 = vsub.s32 %v642, %v1028
        %v1030 = vrot.slane %v909, %v1029
        %v1031 = vlaneseq
        %v1032 = vshrl.u32 %v1031, 7
        %v1033 = vsub.s32 %v642, %v1032
        %v1034 = vrot.slane %v914, %v1033
        %v1035 = vlaneseq
        %v1036 = vshrl.u32 %v1035, 7
        %v1037 = vsub.s32 %v642, %v1036
        %v1038 = vrot.slane %v919, %v1037
        %v1039 = vlaneseq
        %v1040 = vshrl.u32 %v1039, 7
        %v1041 = vsub.s32 %v642, %v1040
        %v1042 = vrot.slane %v924, %v1041
        %v1043 = vlaneseq
        %v1044 = vshrl.u32 %v1043, 7
        %v1045 = vsub.s32 %v642, %v1044
        %v1046 = vrot.slane %v929, %v1045
        %v1047 = vsel %vm675, %v1022, %v1018
        %v1048 = vsel %vm677, %v1026, %v1047
        %v1049 = vsel %vm679, %v1030, %v1048
        %v1050 = vsel %vm681, %v1034, %v1049
        %v1051 = vsel %vm683, %v1038, %v1050
        %v1052 = vsel %vm685, %v1042, %v1051
        %v1053 = vsel %vm687, %v1046, %v1052
        %1056 = vrot.lane.b32.xlu0 %v1014, 9
        %v1057 = vpop.permute.xlu0 %1056
        %v1059 = vsel %vm690, %v1053, %v890
        %vm1060 = vcmask 72704
        %v1061 = vsel %vm1060, %v1059, %v1057
        %vm1062 = vcmask 334848
        %v1063 = vsel %vm1062, %v1061, 0.0
        %1064 = vst [vmem:[%s281] sm:$0xff] %v1063
        %s1065 = sand.u32 %s148, 1
        %s1066 = scalar_lea.sflag [#allocation4], %s1065
        %s1067 = sand.u32 %s148, 1
        %s1068 = smul.addr %s1067, 8
        %s1069 = scalar_lea.vmem [#allocation7], %s1068
        // Predicated region
        $region49: #{tpu_custom_call.1} parent=39 // pred_check
          %p1070 = pneg %p158
        $region50: #{tpu_custom_call.1} parent=39 // pred_check_branch
          %1072 = sbr.rel (%p1070) target = $region52
        $region51: #{tpu_custom_call.1} parent=39 // pred_region
          %s1074 = ssub.s32 128, 128
          %1075 = vsyncadd %s1066, %s1074
          %s1076 = smul.addr %s25, 128
          %s1077 = scalar_lea.hbm %s5, %s1076
          %s1079 = sshll.u32 %s1069, 4
          %s1080 = int_to_ptr.vmem [resolvable:$true] %s1079
          %1082 = dma.vmem_to_hbm [thread:$0]  %s1080, 128, %s1077, %s1066
        $region52: #{tpu_custom_call.1} parent=39 // pred_fallthru
          _
      $region40: #{tpu_custom_call.1} parent=5 // pred_fallthru
        _
      %p1083 = scmp.le.s32.totalorder 2, %s20
      // Predicated region
      $region53: #{tpu_custom_call.1} parent=5 // pred_check
        %p1084 = pneg %p1083
      $region54: #{tpu_custom_call.1} parent=5 // pred_check_branch
        %1086 = sbr.rel (%p1084) target = $region56
      $region55: #{tpu_custom_call.1} parent=5 // pred_region
        %s1087 = ssub.s32 %s20, 2
        // Predicated region
        $region57: #{tpu_custom_call.1} parent=55 // pred_check
          %p1088 = pneg %p164
        $region58: #{tpu_custom_call.1} parent=55 // pred_check_branch
          %1090 = sbr.rel (%p1088) target = $region60
        $region59: #{tpu_custom_call.1} parent=55 // pred_region
          %s1091 = sand.u32 %s149, 1
          %s1092 = scalar_lea.sflag [#allocation4], %s1091
          %s1093 = sand.u32 %s149, 1
          %s1094 = smul.addr %s1093, 8
          %s1095 = scalar_lea.vmem [#allocation7], %s1094
          %1096 = dma.done %s1092, 128
        $region60: #{tpu_custom_call.1} parent=55 // pred_fallthru
          _
      $region56: #{tpu_custom_call.1} parent=5 // pred_fallthru
        _
    $region6: #{tpu_custom_call.1} parent=1 // loop_footer
      %s24 = sadd.s32 1, %s20
    $region7: #{tpu_custom_call.1} parent=1 // loop_footer_branch
      %19 = sbr.rel target = $region3
    $region8: #{tpu_custom_call.1} parent=1 // loop_exit
      _
    %1097 = vsyncpa [#allocation3], 1
    %s1098 = scalar_lea.sflag [#allocation3], 1
    %1099 = vsyncpa %s1098, 1
    %1100 = vsyncpa [#allocation6], 1
    %s1101 = scalar_lea.sflag [#allocation6], 1
    %1102 = vsyncpa %s1101, 1
    %1103 = vsyncpa [#allocation4], 1
    %s1104 = scalar_lea.sflag [#allocation4], 1
    %1105 = vsyncpa %s1104, 1

</llo_original>
